<compile_context>
chip_gen: v5e
topology: v5e:2x2
jax: 0.10.0
libtpu: 0.0.40
codegen_flags: <defaults>
</compile_context>

<pallas_src>
import functools

import jax
import jax.numpy as jnp
from jax.experimental import pallas as pl
from jax.experimental.pallas import tpu as pltpu

_LANES = 128           # vreg lane width
_SUBLANES = 8          # vreg sublane count (f32)
_MAX_BLOCK_ROWS = 512  # rows per grid step: 512*128*4 B = 256 KiB per buffer


def _bits_to_uniform_kernel(bits_ref, out_ref):
    """bits_ref: (rows, 128) uint32 random bits -> out_ref: (rows, 128) f32 in [0, 1)."""
    bits = bits_ref[...]
    # Mantissa trick: keep the top 23 random bits as the mantissa of a float
    # in [1, 2), then subtract 1.0 to get uniform [0, 1) with 2^-23 resolution.
    mant = bits >> jnp.uint32(9)
    fbits = mant | jnp.uint32(0x3F800000)
    out_ref[...] = jax.lax.bitcast_convert_type(fbits, jnp.float32) - jnp.float32(1.0)


@functools.partial(jax.jit, static_argnums=0)
def _random_q_values(num_actions: int, key: jax.Array) -> jax.Array:
    """Uniform [0,1) Q value per action.  num_actions is static -> cached executable."""
    n = max(int(num_actions), 1)
    # Lane-dense layout: pad N up to whole (block_rows, 128) tiles.
    rows = pl.cdiv(n, _LANES)
    rows = pl.cdiv(rows, _SUBLANES) * _SUBLANES          # sublane-align
    block_rows = min(rows, _MAX_BLOCK_ROWS)
    rows = pl.cdiv(rows, block_rows) * block_rows        # whole number of blocks
    grid = (rows // block_rows,)

    bits = jax.random.bits(key, (rows, _LANES), dtype=jnp.uint32)

    tile = pl.pallas_call(
        _bits_to_uniform_kernel,
        out_shape=jax.ShapeDtypeStruct((rows, _LANES), jnp.float32),
        grid=grid,
        in_specs=[pl.BlockSpec((block_rows, _LANES), lambda i: (i, 0))],
        out_specs=pl.BlockSpec((block_rows, _LANES), lambda i: (i, 0)),
        compiler_params=pltpu.CompilerParams(
            dimension_semantics=("parallel",)),
        cost_estimate=pl.CostEstimate(
            flops=3 * rows * _LANES,
            transcendentals=0,
            bytes_accessed=2 * rows * _LANES * 4),
    )(bits)

    # Prefix of the row-major flatten = per-action Q values (fused inside jit).
    return tile.reshape(-1)[:num_actions]


class RandomQFunctionPallas:
    """Mirrors RandomQFunction: a fresh random score per action on every call.

    torch.rand advances the global RNG each forward; we emulate that by
    folding a per-instance call counter into the base key.
    """

    def __init__(self, seed: int = 0):
        self._base_key = jax.random.PRNGKey(seed)
        self._calls = 0

    def __call__(self, actions) -> jax.Array:
        # Only len(actions) matters, exactly like the PyTorch module.
        n = int(actions.shape[0]) if hasattr(actions, "shape") else len(actions)
        key = jax.random.fold_in(self._base_key, self._calls)
        self._calls += 1
        return _random_q_values(n, key)

    def name(self):
        return "RandomQFunction"


if __name__ == "__main__":
    key = jax.random.PRNGKey(0)
    # Placeholder batch of 8 candidate actions with a 32-dim feature each
    # (features are unused by RandomQFunction, just like in PyTorch).
    actions = jax.random.normal(key, (8, 32), dtype=jnp.float32)

    qfn = RandomQFunctionPallas(seed=0)

    q1 = jax.block_until_ready(qfn(actions))
    assert q1.shape == (actions.shape[0],), q1.shape
    assert q1.dtype == jnp.float32
    assert bool(jnp.all(q1 >= 0.0)) and bool(jnp.all(q1 < 1.0))

    # Successive calls advance the RNG (like torch.rand's global generator).
    q2 = jax.block_until_ready(qfn(actions))
    assert q2.shape == q1.shape
    assert not bool(jnp.all(q1 == q2))

    # Larger, non-lane-multiple action count exercises padding + prefix slice.
    big_actions = jax.random.normal(key, (1000, 32), dtype=jnp.float32)
    qb = jax.block_until_ready(qfn(big_actions))
    assert qb.shape == (1000,)
    assert bool(jnp.all(qb >= 0.0)) and bool(jnp.all(qb < 1.0))

    print("KERNEL_OK")
</pallas_src>

<mosaic_0001>
module attributes {stable_mosaic.version = 11 : i64} {
  func.func @_bits_to_uniform_kernel(%arg0: i32, %arg1: memref<8x128xi32, #tpu.memory_space<vmem>>, %arg2: memref<8x128xf32, #tpu.memory_space<vmem>>) attributes {dimension_semantics = [#tpu.dimension_semantics<parallel>], iteration_bounds = array<i64: 1>, scalar_prefetch = 0 : i64, scratch_operands = 0 : i64, tpu.core_type = #tpu.core_type<tc>, window_params = [{transform_indices = @transform_0, window_bounds = array<i64: 8, 128>}, {transform_indices = @transform_1, window_bounds = array<i64: 8, 128>}]} {
    %c0 = arith.constant 0 : index
    %c0_0 = arith.constant 0 : index
    %0 = vector.load %arg1[%c0, %c0_0] : memref<8x128xi32, #tpu.memory_space<vmem>>, vector<8x128xi32>
    %c9_i32 = arith.constant 9 : i32
    %1 = vector.broadcast %c9_i32 : i32 to vector<8x128xi32>
    %2 = arith.shrui %0, %1 : vector<8x128xi32>
    %c1065353216_i32 = arith.constant 1065353216 : i32
    %3 = vector.broadcast %c1065353216_i32 : i32 to vector<8x128xi32>
    %4 = arith.ori %2, %3 : vector<8x128xi32>
    %5 = tpu.bitcast %4 : vector<8x128xi32> -> vector<8x128xf32>
    %cst = arith.constant 1.000000e+00 : f32
    %6 = vector.broadcast %cst : f32 to vector<8x128xf32>
    %7 = arith.subf %5, %6 : vector<8x128xf32>
    %c0_1 = arith.constant 0 : index
    %c0_2 = arith.constant 0 : index
    %8 = vector.load %arg2[%c0_1, %c0_2] : memref<8x128xf32, #tpu.memory_space<vmem>>, vector<8x128xf32>
    tpu.vector_store %arg2[%c0_1, %c0_2], %7 {strides = array<i32>} : memref<8x128xf32, #tpu.memory_space<vmem>>, vector<8x128xf32>,
    return
  }
  func.func @transform_0(%arg0: i32) -> (i32, i32) {
    %c0_i32 = arith.constant 0 : i32
    %c0_i32_0 = arith.constant 0 : i32
    return %arg0, %c0_i32 : i32, i32
  }
  func.func @transform_1(%arg0: i32) -> (i32, i32) {
    %c0_i32 = arith.constant 0 : i32
    %c0_i32_0 = arith.constant 0 : i32
    return %arg0, %c0_i32 : i32, i32
  }
}

</mosaic_0001>

<llo_original>
// kernel: _random_q_values.1
$region0: #{_random_q_values.1}
  #allocation0 [shape = 'u32[]', space=smem, size = 0x4, offset = 0x4, fixed_abs, tag = 'smem constant byte address 0x4 - core index']
  #allocation1 [shape = 'u32[72,128]{1,0:T(1,128)}', space=vmem, size = 0x9000, scoped, tag = 'internal scratch']
  %s0 = inlined_call_operand.vmem [shape: u32[8,128], index: 0, kind: input, shape index: {}]
  %s1 = inlined_call_operand.vmem [shape: f32[8,128], index: 1, kind: output, shape index: {}]
  %s2 = sld [smem:[#allocation0]]
  $region14: #{_random_q_values.1} parent=0
    _
  %s4 = ssub.s32 1, %s2
  %s5 = scalar_select 0, %s4, %s2
  // Predicated region
  $region2: #{_random_q_values.1} parent=0 // pred_check
    _
  $region3: #{_random_q_values.1} parent=0 // pred_check_branch
    %7 = sbr.rel (0) target = $region5
  $region4: #{_random_q_values.1} parent=0 // pred_region
    _
  $region5: #{_random_q_values.1} parent=0 // pred_fallthru
    _
  %v8 = vld [vmem:[%s0] sm:$0xff]
  %v9 = vshrl.u32 %v8, 9
  %v10 = vor.u32 %v9, 1065353216
  %v12 = vsub.f32 %v10, 1.0
  %13 = vst [vmem:[%s1] sm:$0xff] %v12
  // Predicated region
  $region6: #{_random_q_values.1} parent=0 // pred_check
    _
  $region7: #{_random_q_values.1} parent=0 // pred_check_branch
    %15 = sbr.rel (0) target = $region9
  $region8: #{_random_q_values.1} parent=0 // pred_region
    _
  $region9: #{_random_q_values.1} parent=0 // pred_fallthru
    _
  // Predicated region
  $region10: #{_random_q_values.1} parent=0 // pred_check
    _
  $region11: #{_random_q_values.1} parent=0 // pred_check_branch
    %17 = sbr.rel (0) target = $region13
  $region12: #{_random_q_values.1} parent=0 // pred_region
    _
  $region13: #{_random_q_values.1} parent=0 // pred_fallthru
    _

</llo_original>
